<compile_context>
chip_gen: v7x
topology: tpu7x:2x2x1
jax: 0.10.0
libtpu: 0.0.40
codegen_flags: <defaults>
</compile_context>

<pallas_src>
import functools

import jax
import jax.numpy as jnp
from jax.experimental import pallas as pl
from jax.experimental.pallas import tpu as pltpu


# ---------------------------------------------------------------------------
# small helpers
# ---------------------------------------------------------------------------
def _round_up(x, m):
    return (x + m - 1) // m * m


def _row_tile(m, target):
    """Row tile: multiple of 16 (one bf16 vreg holds [16,128]), <= target."""
    tm = min(_round_up(target, 16), _round_up(m, 16))
    return tm, _round_up(m, tm)


def _vmem_budget(est_bytes):
    """~75% of per-core VMEM (48 MiB on v7x, 96 MiB on v5e/v6e), >= 16 MiB floor."""
    try:
        cap = int(pltpu.get_tpu_info().vmem_capacity_bytes)
    except Exception:
        cap = 64 << 20  # conservative (v7x per-TC physical)
    return int(min(max(2 * est_bytes, 16 << 20), (cap * 3) // 4))


def _const_spec(shape, index_map):
    """Grid-constant block: single-buffered if pipeline_mode is supported."""
    try:
        return pl.BlockSpec(shape, index_map, pipeline_mode=pl.Buffered(1))
    except Exception:
        return pl.BlockSpec(shape, index_map)


# ---------------------------------------------------------------------------
# Fused kernel:
#   NNHead (linear H->H + ReLU + linear H->H + ReLU + linear H->V) fused with the
#   base lm_head (H->V) and an online logsumexp + label-token gather over vocab
#   tiles.  grid = (row_tiles, vocab_tiles); vocab axis is a reduction ("arbitrary").
#   Output: (tm, 128) lane-dense slab of token log-probs (broadcast across lanes).
# ---------------------------------------------------------------------------
def _fused_head_logprob_kernel(x_ref, w1_ref, b1_ref, w2_ref, b2_ref,
                               w3_ref, b3_ref, wlm_ref, blm_ref, labels_ref,
                               lp_ref, h_ref, m_sc, l_sc, tok_sc,
                               *, v_actual, v_padded, tn):
    j = pl.program_id(1)

    @pl.when(j == 0)
    def _():
        # Two H->H layers computed once per row tile; result reused for every vocab tile.
        x = x_ref[...]                                                    # bf16 (tm, H)
        h = jnp.dot(x, w1_ref[...], preferred_element_type=jnp.float32)
        h = jnp.maximum(h + b1_ref[...], 0.0).astype(jnp.bfloat16)        # ReLU 1
        h = jnp.dot(h, w2_ref[...], preferred_element_type=jnp.float32)
        h = jnp.maximum(h + b2_ref[...], 0.0)                             # ReLU 2
        h_ref[...] = h.astype(h_ref.dtype)                                # bf16 scratch
        # online-logsumexp / token-logit accumulators
        m_sc[...] = jnp.full_like(m_sc, -jnp.inf)
        l_sc[...] = jnp.zeros_like(l_sc)
        tok_sc[...] = jnp.zeros_like(tok_sc)

    # combined logits tile = base lm_head + modulation head (f32 accumulate on MXU)
    base = jnp.dot(x_ref[...], wlm_ref[...],
                   preferred_element_type=jnp.float32) + blm_ref[...]
    mod = jnp.dot(h_ref[...], w3_ref[...],
                  preferred_element_type=jnp.float32) + b3_ref[...]
    combined = base + mod                                                 # f32 (tm, tn)

    col = j * tn + jax.lax.broadcasted_iota(jnp.int32, combined.shape, 1)
    if v_padded != v_actual:
        # mask vocab-padding columns before they touch the running max / sum
        combined = jnp.where(col < v_actual, combined, jnp.float32(-1e30))

    m_prev = m_sc[...]
    m_new = jnp.maximum(m_prev, jnp.max(combined, axis=-1, keepdims=True))
    alpha = jnp.exp(m_prev - m_new)
    l_sc[...] = alpha * l_sc[...] + jnp.sum(jnp.exp(combined - m_new),
                                            axis=-1, keepdims=True)
    m_sc[...] = m_new
    # label-token logit: the label falls in exactly one vocab tile
    tok_sc[...] = tok_sc[...] + jnp.sum(
        jnp.where(col == labels_ref[...], combined, 0.0), axis=-1, keepdims=True)

    @pl.when(j == pl.num_programs(1) - 1)
    def _():
        tok = tok_sc[...] - (m_sc[...] + jnp.log(l_sc[...]))              # (tm, 1)
        lp_ref[...] = jnp.broadcast_to(tok, lp_ref.shape).astype(lp_ref.dtype)


def fused_head_token_log_probs(x, labels, w1, b1, w2, b2, w3, b3, w_lm, b_lm,
                               *, tm_target=256):
    """x: (M, H) bf16, labels: (M, 1) int32.
    Returns (M,) f32 token log-probs of log_softmax(x@w_lm+b_lm + NNHead(x))[labels]."""
    M, H = x.shape
    V = w3.shape[1]
    tm, m_pad = _row_tile(M, tm_target)
    v_pad = _round_up(V, 256)
    tn = 512 if v_pad % 512 == 0 else 256
    tn = min(tn, v_pad)

    if m_pad != M:
        x = jnp.pad(x, ((0, m_pad - M), (0, 0)))
        labels = jnp.pad(labels, ((0, m_pad - M), (0, 0)))
    if v_pad != V:
        pv = ((0, 0), (0, v_pad - V))
        w3, b3, w_lm, b_lm = (jnp.pad(a, pv) for a in (w3, b3, w_lm, b_lm))

    grid = (m_pad // tm, v_pad // tn)
    const = lambda i, j: (0, 0)

    # VMEM estimate: single-buffered constants, double-buffered streamed tiles, scratch.
    est = (2 * tm * H * 2                 # x tile (double-buffered)
           + 2 * H * H * 2                # w1, w2 (single-buffered, bf16)
           + 2 * H * 4                    # b1, b2 (f32)
           + 2 * 2 * H * tn * 2           # w3 + w_lm vocab tiles (double-buffered)
           + 2 * 2 * tn * 4               # b3 + b_lm tiles
           + 2 * tm * 4                   # labels tile
           + 2 * tm * 128 * 4             # output slab
           + tm * H * 2 + 3 * tm * 4)     # h / m / l / tok scratch
    flops = 2 * m_pad * (2 * H * H + 2 * H * v_pad)
    bytes_accessed = ((m_pad * H + 2 * H * H + 2 * H * v_pad) * 2
                      + (2 * H + 2 * v_pad) * 4 + m_pad * 4 + m_pad * 128 * 4)

    kern = functools.partial(_fused_head_logprob_kernel,
                             v_actual=V, v_padded=v_pad, tn=tn)

    lp_slab = pl.pallas_call(
        kern,
        out_shape=jax.ShapeDtypeStruct((m_pad, 128), jnp.float32),
        grid_spec=pltpu.PrefetchScalarGridSpec(
            num_scalar_prefetch=0,
            grid=grid,
            in_specs=[
                pl.BlockSpec((tm, H), lambda i, j: (i, 0)),    # x rows
                _const_spec((H, H), const),                    # w1 (grid-constant)
                _const_spec((1, H), const),                    # b1
                _const_spec((H, H), const),                    # w2
                _const_spec((1, H), const),                    # b2
                pl.BlockSpec((H, tn), lambda i, j: (0, j)),    # w3 vocab tile
                pl.BlockSpec((1, tn), lambda i, j: (0, j)),    # b3 vocab tile
                pl.BlockSpec((H, tn), lambda i, j: (0, j)),    # w_lm vocab tile
                pl.BlockSpec((1, tn), lambda i, j: (0, j)),    # b_lm vocab tile
                pl.BlockSpec((tm, 1), lambda i, j: (i, 0)),    # labels
            ],
            out_specs=pl.BlockSpec((tm, 128), lambda i, j: (i, 0)),
            scratch_shapes=[
                pltpu.VMEM((tm, H), jnp.bfloat16),   # h (hidden after 2 layers)
                pltpu.VMEM((tm, 1), jnp.float32),    # running max
                pltpu.VMEM((tm, 1), jnp.float32),    # running sum
                pltpu.VMEM((tm, 1), jnp.float32),    # token logit accumulator
            ],
        ),
        compiler_params=pltpu.CompilerParams(
            dimension_semantics=("parallel", "arbitrary"),
            vmem_limit_bytes=_vmem_budget(est),
        ),
        cost_estimate=pl.CostEstimate(
            flops=int(flops), transcendentals=int(m_pad * v_pad),
            bytes_accessed=int(bytes_accessed)),
    )(x, w1, b1, w2, b2, w3, b3, w_lm, b_lm, labels)
    return lp_slab[:M, 0]


# ---------------------------------------------------------------------------
# Parameter init (deterministic, synthetic). Weights bf16, biases f32.
# ---------------------------------------------------------------------------
def init_params(key, vocab_size, hidden_size, w_dtype=jnp.bfloat16):
    ks = jax.random.split(key, 5)
    s = 0.02
    n = lambda k, shp: (jax.random.normal(k, shp, jnp.float32) * s).astype(w_dtype)
    return {
        # stub "initial_model": embedding + lm_head
        "embed": n(ks[0], (vocab_size, hidden_size)),
        "w_lm": n(ks[1], (hidden_size, vocab_size)),
        "b_lm": jnp.zeros((1, vocab_size), jnp.float32),
        # NNHead (modulation_nn_head)
        "w1": n(ks[2], (hidden_size, hidden_size)),
        "b1": jnp.zeros((1, hidden_size), jnp.float32),
        "w2": n(ks[3], (hidden_size, hidden_size)),
        "b2": jnp.zeros((1, hidden_size), jnp.float32),
        "w3": n(ks[4], (hidden_size, vocab_size)),
        "b3": jnp.zeros((1, vocab_size), jnp.float32),
    }


# ---------------------------------------------------------------------------
# ActorCustom.forward (return_type='p'): returns action log-probs (B, num_actions)
# ---------------------------------------------------------------------------
def actor_custom_forward(params, sequences, attention_mask, *, num_actions):
    B, S = sequences.shape
    V, H = params["embed"].shape

    # get_position_ids: cumsum(mask) - 1, then masked_fill(mask==0, 1)
    position_ids = jnp.cumsum(attention_mask.astype(jnp.int32), axis=-1) - 1
    position_ids = jnp.where(attention_mask == 0, 1, position_ids)
    del position_ids  # consumed by the (stubbed) base model

    # TODO(synk): the HF base transformer has no clean Pallas equivalent here;
    # stubbed as an embedding lookup producing last_hidden_state (glue JAX).
    last_hidden_state = params["embed"][sequences]                    # (B, S, H) bf16

    # return_type == 'p' only consumes logits[:, :-1, :][:, -num_actions:], i.e.
    # hidden positions [S-1-num_actions, S-1): slice BEFORE any head matmul.
    start = S - 1 - num_actions
    hs = last_hidden_state[:, start:start + num_actions, :]           # (B, A, H)
    x = hs.reshape(B * num_actions, H).astype(jnp.bfloat16)

    # labels = sequences[:, 1:][:, -num_actions:]
    labels = sequences[:, S - num_actions:].reshape(B * num_actions, 1).astype(jnp.int32)

    # fused: base lm_head + NNHead + log_softmax + token gather, all in one kernel
    lp = fused_head_token_log_probs(
        x, labels,
        params["w1"], params["b1"], params["w2"], params["b2"],
        params["w3"], params["b3"], params["w_lm"], params["b_lm"])
    return lp.reshape(B, num_actions)


# ---------------------------------------------------------------------------
# Pure-JAX reference (f32) of the same forward, for a correctness check.
# ---------------------------------------------------------------------------
def _reference_forward(params, sequences, num_actions):
    hs = params["embed"][sequences].astype(jnp.float32)               # (B, S, H)
    lin = lambda x, w, b: x @ w.astype(jnp.float32) + b
    h = jnp.maximum(lin(hs, params["w1"], params["b1"]), 0.0)
    h = jnp.maximum(lin(h, params["w2"], params["b2"]), 0.0)
    mod = lin(h, params["w3"], params["b3"])
    base = lin(hs, params["w_lm"], params["b_lm"])
    logp = jax.nn.log_softmax(base[:, :-1] + mod[:, :-1], axis=-1)
    labels = sequences[:, 1:]
    tok = jnp.take_along_axis(logp, labels[..., None], axis=-1)[..., 0]
    return tok[:, -num_actions:]


if __name__ == "__main__":
    B, S, H, V = 2, 8, 128, 256
    num_actions = 4

    key = jax.random.PRNGKey(0)
    pkey, skey = jax.random.split(key)
    params = init_params(pkey, V, H)
    sequences = jax.random.randint(skey, (B, S), 0, V, dtype=jnp.int32)
    attention_mask = jnp.ones((B, S), dtype=jnp.int32)

    fwd = jax.jit(functools.partial(actor_custom_forward, num_actions=num_actions))
    out = fwd(params, sequences, attention_mask)
    jax.block_until_ready(out)

    ref = _reference_forward(params, sequences, num_actions)
    assert out.shape == (B, num_actions)
    assert bool(jnp.all(jnp.isfinite(out)))
    assert bool(jnp.allclose(out, ref, atol=3e-2, rtol=3e-2))
    print("KERNEL_OK")
</pallas_src>

<mosaic_0001>
module attributes {stable_mosaic.version = 11 : i64} {
  func.func @_fused_head_logprob_kernel(%arg0: i32, %arg1: i32, %arg2: memref<16x128xbf16, #tpu.memory_space<vmem>>, %arg3: memref<128x128xbf16, #tpu.memory_space<vmem>>, %arg4: memref<1x128xf32, #tpu.memory_space<vmem>>, %arg5: memref<128x128xbf16, #tpu.memory_space<vmem>>, %arg6: memref<1x128xf32, #tpu.memory_space<vmem>>, %arg7: memref<128x256xbf16, #tpu.memory_space<vmem>>, %arg8: memref<1x256xf32, #tpu.memory_space<vmem>>, %arg9: memref<128x256xbf16, #tpu.memory_space<vmem>>, %arg10: memref<1x256xf32, #tpu.memory_space<vmem>>, %arg11: memref<16x1xi32, #tpu.memory_space<vmem>>, %arg12: memref<16x128xf32, #tpu.memory_space<vmem>>, %arg13: memref<16x128xbf16, #tpu.memory_space<vmem>>, %arg14: memref<16x1xf32, #tpu.memory_space<vmem>>, %arg15: memref<16x1xf32, #tpu.memory_space<vmem>>, %arg16: memref<16x1xf32, #tpu.memory_space<vmem>>) attributes {dimension_semantics = [#tpu.dimension_semantics<parallel>, #tpu.dimension_semantics<arbitrary>], iteration_bounds = array<i64: 1, 1>, scalar_prefetch = 0 : i64, scratch_operands = 4 : i64, tpu.core_type = #tpu.core_type<tc>, window_params = [{transform_indices = @transform_0, window_bounds = array<i64: 16, 128>}, {pipeline_mode = #tpu.pipeline_mode<synchronous>, transform_indices = @transform_1, window_bounds = array<i64: 128, 128>}, {pipeline_mode = #tpu.pipeline_mode<synchronous>, transform_indices = @transform_2, window_bounds = array<i64: 1, 128>}, {pipeline_mode = #tpu.pipeline_mode<synchronous>, transform_indices = @transform_3, window_bounds = array<i64: 128, 128>}, {pipeline_mode = #tpu.pipeline_mode<synchronous>, transform_indices = @transform_4, window_bounds = array<i64: 1, 128>}, {transform_indices = @transform_5, window_bounds = array<i64: 128, 256>}, {transform_indices = @transform_6, window_bounds = array<i64: 1, 256>}, {transform_indices = @transform_7, window_bounds = array<i64: 128, 256>}, {transform_indices = @transform_8, window_bounds = array<i64: 1, 256>}, {transform_indices = @transform_9, window_bounds = array<i64: 16, 1>}, {transform_indices = @transform_10, window_bounds = array<i64: 16, 128>}]} {
    %c0_i32 = arith.constant 0 : i32
    %0 = arith.cmpi eq, %arg1, %c0_i32 : i32
    %1 = arith.extui %0 : i1 to i32
    %c0_i32_0 = arith.constant 0 : i32
    %2 = arith.cmpi ne, %1, %c0_i32_0 : i32
    scf.if %2 {
      %c0_33 = arith.constant 0 : index
      %c0_34 = arith.constant 0 : index
      %49 = vector.load %arg2[%c0_33, %c0_34] : memref<16x128xbf16, #tpu.memory_space<vmem>>, vector<16x128xbf16>
      %c0_35 = arith.constant 0 : index
      %c0_36 = arith.constant 0 : index
      %50 = vector.load %arg3[%c0_35, %c0_36] : memref<128x128xbf16, #tpu.memory_space<vmem>>, vector<128x128xbf16>
      %cst_37 = arith.constant dense<0.000000e+00> : vector<16x128xf32>
      %51 = tpu.matmul %49, %50, %cst_37 {dimension_numbers = #tpu.dot_dimension_numbers<[1], [0], [0], [1], [0, 0, 1, 1], [], []>} : vector<16x128xbf16>, vector<128x128xbf16>, vector<16x128xf32> -> vector<16x128xf32>
      %c0_38 = arith.constant 0 : index
      %c0_39 = arith.constant 0 : index
      %52 = vector.load %arg4[%c0_38, %c0_39] : memref<1x128xf32, #tpu.memory_space<vmem>>, vector<1x128xf32>
      %53 = vector.broadcast %52 : vector<1x128xf32> to vector<16x128xf32>
      %54 = arith.addf %51, %53 : vector<16x128xf32>
      %cst_40 = arith.constant 0.000000e+00 : f32
      %55 = vector.broadcast %cst_40 : f32 to vector<16x128xf32>
      %56 = arith.maximumf %54, %55 : vector<16x128xf32>
      %57 = arith.truncf %56 : vector<16x128xf32> to vector<16x128xbf16>
      %c0_41 = arith.constant 0 : index
      %c0_42 = arith.constant 0 : index
      %58 = vector.load %arg5[%c0_41, %c0_42] : memref<128x128xbf16, #tpu.memory_space<vmem>>, vector<128x128xbf16>
      %cst_43 = arith.constant dense<0.000000e+00> : vector<16x128xf32>
      %59 = tpu.matmul %57, %58, %cst_43 {dimension_numbers = #tpu.dot_dimension_numbers<[1], [0], [0], [1], [0, 0, 1, 1], [], []>} : vector<16x128xbf16>, vector<128x128xbf16>, vector<16x128xf32> -> vector<16x128xf32>
      %c0_44 = arith.constant 0 : index
      %c0_45 = arith.constant 0 : index
      %60 = vector.load %arg6[%c0_44, %c0_45] : memref<1x128xf32, #tpu.memory_space<vmem>>, vector<1x128xf32>
      %61 = vector.broadcast %60 : vector<1x128xf32> to vector<16x128xf32>
      %62 = arith.addf %59, %61 : vector<16x128xf32>
      %cst_46 = arith.constant 0.000000e+00 : f32
      %63 = vector.broadcast %cst_46 : f32 to vector<16x128xf32>
      %64 = arith.maximumf %62, %63 : vector<16x128xf32>
      %65 = arith.truncf %64 : vector<16x128xf32> to vector<16x128xbf16>
      %c0_47 = arith.constant 0 : index
      %c0_48 = arith.constant 0 : index
      %66 = vector.load %arg13[%c0_47, %c0_48] : memref<16x128xbf16, #tpu.memory_space<vmem>>, vector<16x128xbf16>
      tpu.vector_store %arg13[%c0_47, %c0_48], %65 {strides = array<i32>} : memref<16x128xbf16, #tpu.memory_space<vmem>>, vector<16x128xbf16>,
      %cst_49 = arith.constant 0xFF800000 : f32
      %67 = vector.broadcast %cst_49 : f32 to vector<16x1xf32>
      %c0_50 = arith.constant 0 : index
      %c0_51 = arith.constant 0 : index
      %68 = vector.load %arg14[%c0_50, %c0_51] : memref<16x1xf32, #tpu.memory_space<vmem>>, vector<16x1xf32>
      tpu.vector_store %arg14[%c0_50, %c0_51], %67 {strides = array<i32>} : memref<16x1xf32, #tpu.memory_space<vmem>>, vector<16x1xf32>,
      %cst_52 = arith.constant 0.000000e+00 : f32
      %69 = vector.broadcast %cst_52 : f32 to vector<16x1xf32>
      %c0_53 = arith.constant 0 : index
      %c0_54 = arith.constant 0 : index
      %70 = vector.load %arg15[%c0_53, %c0_54] : memref<16x1xf32, #tpu.memory_space<vmem>>, vector<16x1xf32>
      tpu.vector_store %arg15[%c0_53, %c0_54], %69 {strides = array<i32>} : memref<16x1xf32, #tpu.memory_space<vmem>>, vector<16x1xf32>,
      %cst_55 = arith.constant 0.000000e+00 : f32
      %71 = vector.broadcast %cst_55 : f32 to vector<16x1xf32>
      %c0_56 = arith.constant 0 : index
      %c0_57 = arith.constant 0 : index
      %72 = vector.load %arg16[%c0_56, %c0_57] : memref<16x1xf32, #tpu.memory_space<vmem>>, vector<16x1xf32>
      tpu.vector_store %arg16[%c0_56, %c0_57], %71 {strides = array<i32>} : memref<16x1xf32, #tpu.memory_space<vmem>>, vector<16x1xf32>,
    } else {
    }
    %c0 = arith.constant 0 : index
    %c0_1 = arith.constant 0 : index
    %3 = vector.load %arg2[%c0, %c0_1] : memref<16x128xbf16, #tpu.memory_space<vmem>>, vector<16x128xbf16>
    %c0_2 = arith.constant 0 : index
    %c0_3 = arith.constant 0 : index
    %4 = vector.load %arg9[%c0_2, %c0_3] : memref<128x256xbf16, #tpu.memory_space<vmem>>, vector<128x256xbf16>
    %cst = arith.constant dense<0.000000e+00> : vector<16x256xf32>
    %5 = tpu.matmul %3, %4, %cst {dimension_numbers = #tpu.dot_dimension_numbers<[1], [0], [0], [1], [0, 0, 1, 1], [], []>} : vector<16x128xbf16>, vector<128x256xbf16>, vector<16x256xf32> -> vector<16x256xf32>
    %c0_4 = arith.constant 0 : index
    %c0_5 = arith.constant 0 : index
    %6 = vector.load %arg10[%c0_4, %c0_5] : memref<1x256xf32, #tpu.memory_space<vmem>>, vector<1x256xf32>
    %7 = vector.broadcast %6 : vector<1x256xf32> to vector<16x256xf32>
    %8 = arith.addf %5, %7 : vector<16x256xf32>
    %c0_6 = arith.constant 0 : index
    %c0_7 = arith.constant 0 : index
    %9 = vector.load %arg13[%c0_6, %c0_7] : memref<16x128xbf16, #tpu.memory_space<vmem>>, vector<16x128xbf16>
    %c0_8 = arith.constant 0 : index
    %c0_9 = arith.constant 0 : index
    %10 = vector.load %arg7[%c0_8, %c0_9] : memref<128x256xbf16, #tpu.memory_space<vmem>>, vector<128x256xbf16>
    %cst_10 = arith.constant dense<0.000000e+00> : vector<16x256xf32>
    %11 = tpu.matmul %9, %10, %cst_10 {dimension_numbers = #tpu.dot_dimension_numbers<[1], [0], [0], [1], [0, 0, 1, 1], [], []>} : vector<16x128xbf16>, vector<128x256xbf16>, vector<16x256xf32> -> vector<16x256xf32>
    %c0_11 = arith.constant 0 : index
    %c0_12 = arith.constant 0 : index
    %12 = vector.load %arg8[%c0_11, %c0_12] : memref<1x256xf32, #tpu.memory_space<vmem>>, vector<1x256xf32>
    %13 = vector.broadcast %12 : vector<1x256xf32> to vector<16x256xf32>
    %14 = arith.addf %11, %13 : vector<16x256xf32>
    %15 = arith.addf %8, %14 : vector<16x256xf32>
    %c256_i32 = arith.constant 256 : i32
    %16 = arith.muli %arg1, %c256_i32 : i32
    %17 = tpu.iota {dimensions = array<i32: 1>} : vector<16x256xi32>
    %18 = vector.broadcast %16 : i32 to vector<16x256xi32>
    %19 = arith.addi %18, %17 : vector<16x256xi32>
    %c0_13 = arith.constant 0 : index
    %c0_14 = arith.constant 0 : index
    %20 = vector.load %arg14[%c0_13, %c0_14] : memref<16x1xf32, #tpu.memory_space<vmem>>, vector<16x1xf32>
    %cst_15 = arith.constant dense<0xFF800000> : vector<16xf32>
    %21 = vector.multi_reduction <maximumf>, %15, %cst_15 [1] : vector<16x256xf32> to vector<16xf32>
    %22 = vector.shape_cast %21 : vector<16xf32> to vector<16x1xf32>
    %23 = arith.maximumf %20, %22 : vector<16x1xf32>
    %24 = arith.subf %20, %23 : vector<16x1xf32>
    %25 = math.exp %24 : vector<16x1xf32>
    %c0_16 = arith.constant 0 : index
    %c0_17 = arith.constant 0 : index
    %26 = vector.load %arg15[%c0_16, %c0_17] : memref<16x1xf32, #tpu.memory_space<vmem>>, vector<16x1xf32>
    %27 = arith.mulf %25, %26 : vector<16x1xf32>
    %28 = vector.broadcast %23 : vector<16x1xf32> to vector<16x256xf32>
    %29 = arith.subf %15, %28 : vector<16x256xf32>
    %30 = math.exp %29 : vector<16x256xf32>
    %cst_18 = arith.constant dense<0.000000e+00> : vector<16xf32>
    %31 = vector.multi_reduction <add>, %30, %cst_18 [1] : vector<16x256xf32> to vector<16xf32>
    %32 = vector.shape_cast %31 : vector<16xf32> to vector<16x1xf32>
    %33 = arith.addf %27, %32 : vector<16x1xf32>
    %c0_19 = arith.constant 0 : index
    %c0_20 = arith.constant 0 : index
    %34 = vector.load %arg15[%c0_19, %c0_20] : memref<16x1xf32, #tpu.memory_space<vmem>>, vector<16x1xf32>
    tpu.vector_store %arg15[%c0_19, %c0_20], %33 {strides = array<i32>} : memref<16x1xf32, #tpu.memory_space<vmem>>, vector<16x1xf32>,
    %c0_21 = arith.constant 0 : index
    %c0_22 = arith.constant 0 : index
    %35 = vector.load %arg14[%c0_21, %c0_22] : memref<16x1xf32, #tpu.memory_space<vmem>>, vector<16x1xf32>
    tpu.vector_store %arg14[%c0_21, %c0_22], %23 {strides = array<i32>} : memref<16x1xf32, #tpu.memory_space<vmem>>, vector<16x1xf32>,
    %c0_23 = arith.constant 0 : index
    %c0_24 = arith.constant 0 : index
    %36 = vector.load %arg16[%c0_23, %c0_24] : memref<16x1xf32, #tpu.memory_space<vmem>>, vector<16x1xf32>
    %c0_25 = arith.constant 0 : index
    %c0_26 = arith.constant 0 : index
    %37 = vector.load %arg11[%c0_25, %c0_26] : memref<16x1xi32, #tpu.memory_space<vmem>>, vector<16x1xi32>
    %38 = vector.broadcast %37 : vector<16x1xi32> to vector<16x256xi32>
    %39 = arith.cmpi eq, %19, %38 : vector<16x256xi32>
    %cst_27 = arith.constant 0.000000e+00 : f32
    %40 = vector.broadcast %cst_27 : f32 to vector<16x256xf32>
    %41 = arith.select %39, %15, %40 : vector<16x256xi1>, vector<16x256xf32>
    %cst_28 = arith.constant dense<0.000000e+00> : vector<16xf32>
    %42 = vector.multi_reduction <add>, %41, %cst_28 [1] : vector<16x256xf32> to vector<16xf32>
    %43 = vector.shape_cast %42 : vector<16xf32> to vector<16x1xf32>
    %44 = arith.addf %36, %43 : vector<16x1xf32>
    %c0_29 = arith.constant 0 : index
    %c0_30 = arith.constant 0 : index
    %45 = vector.load %arg16[%c0_29, %c0_30] : memref<16x1xf32, #tpu.memory_space<vmem>>, vector<16x1xf32>
    tpu.vector_store %arg16[%c0_29, %c0_30], %44 {strides = array<i32>} : memref<16x1xf32, #tpu.memory_space<vmem>>, vector<16x1xf32>,
    %c0_i32_31 = arith.constant 0 : i32
    %46 = arith.cmpi eq, %arg1, %c0_i32_31 : i32
    %47 = arith.extui %46 : i1 to i32
    %c0_i32_32 = arith.constant 0 : i32
    %48 = arith.cmpi ne, %47, %c0_i32_32 : i32
    scf.if %48 {
      %c0_33 = arith.constant 0 : index
      %c0_34 = arith.constant 0 : index
      %49 = vector.load %arg16[%c0_33, %c0_34] : memref<16x1xf32, #tpu.memory_space<vmem>>, vector<16x1xf32>
      %c0_35 = arith.constant 0 : index
      %c0_36 = arith.constant 0 : index
      %50 = vector.load %arg14[%c0_35, %c0_36] : memref<16x1xf32, #tpu.memory_space<vmem>>, vector<16x1xf32>
      %c0_37 = arith.constant 0 : index
      %c0_38 = arith.constant 0 : index
      %51 = vector.load %arg15[%c0_37, %c0_38] : memref<16x1xf32, #tpu.memory_space<vmem>>, vector<16x1xf32>
      %52 = math.log %51 : vector<16x1xf32>
      %53 = arith.addf %50, %52 : vector<16x1xf32>
      %54 = arith.subf %49, %53 : vector<16x1xf32>
      %55 = vector.shape_cast %54 : vector<16x1xf32> to vector<16x1xf32>
      %56 = vector.broadcast %55 : vector<16x1xf32> to vector<16x128xf32>
      %c0_39 = arith.constant 0 : index
      %c0_40 = arith.constant 0 : index
      %57 = vector.load %arg12[%c0_39, %c0_40] : memref<16x128xf32, #tpu.memory_space<vmem>>, vector<16x128xf32>
      tpu.vector_store %arg12[%c0_39, %c0_40], %56 {strides = array<i32>} : memref<16x128xf32, #tpu.memory_space<vmem>>, vector<16x128xf32>,
    } else {
    }
    return
  }
  func.func @transform_0(%arg0: i32, %arg1: i32) -> (i32, i32) {
    %c0_i32 = arith.constant 0 : i32
    %c0_i32_0 = arith.constant 0 : i32
    return %arg0, %c0_i32 : i32, i32
  }
  func.func @transform_1(%arg0: i32, %arg1: i32) -> (i32, i32) {
    %c0_i32 = arith.constant 0 : i32
    %c0_i32_0 = arith.constant 0 : i32
    %c0_i32_1 = arith.constant 0 : i32
    return %c0_i32, %c0_i32_0 : i32, i32
  }
  func.func @transform_2(%arg0: i32, %arg1: i32) -> (i32, i32) {
    %c0_i32 = arith.constant 0 : i32
    %c0_i32_0 = arith.constant 0 : i32
    %c0_i32_1 = arith.constant 0 : i32
    return %c0_i32, %c0_i32_0 : i32, i32
  }
  func.func @transform_3(%arg0: i32, %arg1: i32) -> (i32, i32) {
    %c0_i32 = arith.constant 0 : i32
    %c0_i32_0 = arith.constant 0 : i32
    %c0_i32_1 = arith.constant 0 : i32
    return %c0_i32, %c0_i32_0 : i32, i32
  }
  func.func @transform_4(%arg0: i32, %arg1: i32) -> (i32, i32) {
    %c0_i32 = arith.constant 0 : i32
    %c0_i32_0 = arith.constant 0 : i32
    %c0_i32_1 = arith.constant 0 : i32
    return %c0_i32, %c0_i32_0 : i32, i32
  }
  func.func @transform_5(%arg0: i32, %arg1: i32) -> (i32, i32) {
    %c0_i32 = arith.constant 0 : i32
    %c0_i32_0 = arith.constant 0 : i32
    return %c0_i32, %arg1 : i32, i32
  }
  func.func @transform_6(%arg0: i32, %arg1: i32) -> (i32, i32) {
    %c0_i32 = arith.constant 0 : i32
    %c0_i32_0 = arith.constant 0 : i32
    return %c0_i32, %arg1 : i32, i32
  }
  func.func @transform_7(%arg0: i32, %arg1: i32) -> (i32, i32) {
    %c0_i32 = arith.constant 0 : i32
    %c0_i32_0 = arith.constant 0 : i32
    return %c0_i32, %arg1 : i32, i32
  }
  func.func @transform_8(%arg0: i32, %arg1: i32) -> (i32, i32) {
    %c0_i32 = arith.constant 0 : i32
    %c0_i32_0 = arith.constant 0 : i32
    return %c0_i32, %arg1 : i32, i32
  }
  func.func @transform_9(%arg0: i32, %arg1: i32) -> (i32, i32) {
    %c0_i32 = arith.constant 0 : i32
    %c0_i32_0 = arith.constant 0 : i32
    return %arg0, %c0_i32 : i32, i32
  }
  func.func @transform_10(%arg0: i32, %arg1: i32) -> (i32, i32) {
    %c0_i32 = arith.constant 0 : i32
    %c0_i32_0 = arith.constant 0 : i32
    return %arg0, %c0_i32 : i32, i32
  }
}

</mosaic_0001>

<llo_original>
// kernel: squeeze.1
$region0: #{squeeze.1}
  %s0 = inlined_call_operand.vmem [shape: f32[8], index: 0, kind: input, shape index: {}]
  %s1 = inlined_call_operand.hbm [shape: f32[2,4], index: 1, kind: output, shape index: {}]
  $region1: #{squeeze.1} parent=0
    #allocation0 [shape = 'u8[1024]{0}', space=vmem, size = 0x400, scoped, tag = 'operand span for operand 1']
    #allocation1 [shape = 's32[1]{0}', space=sflag, size = 0x4, scoped, tag = 'scoped memory for squeeze.1']
    #allocation2 [shape = 'u8[4096]{0}', space=vmem, size = 0x1000, scoped, tag = 'scoped mem for output reshape']
    #allocation3 [shape = 'u8[4096]{0}', space=vmem, size = 0x1000, scoped, tag = 'scoped mem for input reshape']
    %2 = vsyncpa [#allocation1], 0
    %s4 = sshllo.u32 0, 1
    %v5 = vld [vmem:[%s0] sm:%s4]
    %6 = vst [vmem:[#allocation3] sm:%s4] %v5
    %v7 = vld [vmem:[#allocation3] sm:$0x1]
    %vm8 = vcmask 31744
    %9 = vst.msk [vmem:[#allocation2] sm:$0x1] %vm8, %v7
    %v10 = vld [vmem:[#allocation3] sm:$0x1]
    %11 = vrot.lane.b32.xlu0 %v10, 124
    %v12 = vpop.permute.xlu0 %11
    %vm13 = vcmask 31744
    %s14 = scalar_lea.vmem [#allocation2], 1
    %15 = vst.msk [vmem:[%s14] sm:$0x1] %vm13, %v12
    %s17 = sshllo.u32 0, 2
    %v19 = vld [vmem:[#allocation2] sm:%s17]
    %s20 = sshllo.u32 0, 2
    %21 = vst [vmem:[#allocation0] sm:%s20] %v19
    %s23 = ssub.s32 32, 32
    %24 = vsyncadd [#allocation1], %s23
    %s26 = sshll.u32 [#allocation0], 4
    %s27 = int_to_ptr.vmem [resolvable:$true] %s26
    %29 = dma.vmem_to_hbm [thread:$0]  %s27, 32, %s1, [#allocation1]
    %30 = dma.done [#allocation1], 32
    %31 = vsyncpa [#allocation1], 1

// kernel: actor_custom_forward.1
$region0: #{actor_custom_forward.1}
  #allocation0 [shape = 'u32[]', space=smem, size = 0x4, offset = 0x4, fixed_abs, tag = 'smem constant byte address 0x4 - core index']
  #allocation1 [shape = 'u32[144,128]{1,0:T(1,128)}', space=vmem, size = 0x12000, scoped, tag = 'internal scratch']
  #allocation2 [shape = 'bf16[16,128]{1,0:T(16,128)(2,1)}', space=vmem, size = 0x1000, scoped, tag = 'scratch operand']
  #allocation3 [shape = 'f32[16,1]{1,0:T(8,128)}', space=vmem, size = 0x2000, scoped, tag = 'scratch operand']
  #allocation4 [shape = 'f32[16,1]{1,0:T(8,128)}', space=vmem, size = 0x2000, scoped, tag = 'scratch operand']
  #allocation5 [shape = 'f32[16,1]{1,0:T(8,128)}', space=vmem, size = 0x2000, scoped, tag = 'scratch operand']
  %s0 = inlined_call_operand.vmem [shape: bf16[16,128], index: 0, kind: input, shape index: {}]
  %s1 = inlined_call_operand.hbm [shape: bf16[128,128], index: 1, kind: input, shape index: {}]
  %s2 = inlined_call_operand.vmem [shape: f32[1,128], index: 2, kind: input, shape index: {}]
  %s3 = inlined_call_operand.hbm [shape: bf16[128,128], index: 3, kind: input, shape index: {}]
  %s4 = inlined_call_operand.vmem [shape: f32[1,128], index: 4, kind: input, shape index: {}]
  %s5 = inlined_call_operand.vmem [shape: bf16[128,256], index: 5, kind: input, shape index: {}]
  %s6 = inlined_call_operand.vmem [shape: f32[1,256], index: 6, kind: input, shape index: {}]
  %s7 = inlined_call_operand.hbm [shape: bf16[128,256], index: 7, kind: input, shape index: {}]
  %s8 = inlined_call_operand.vmem [shape: f32[1,256], index: 8, kind: input, shape index: {}]
  %s9 = inlined_call_operand.vmem [shape: s32[16,1], index: 9, kind: input, shape index: {}]
  %s10 = inlined_call_operand.vmem [shape: f32[16,128], index: 10, kind: output, shape index: {}]
  %s11 = sld [smem:[#allocation0]]
  $region70: #{actor_custom_forward.1} parent=0
    _
  %s13 = ssub.s32 1, %s11
  %s14 = scalar_select 0, %s13, %s11
  $region1: #{actor_custom_forward.1} parent=0
    #allocation6 [shape = 'u8[32768]{0}', space=vmem, size = 0x8000, scoped, tag = 'input window, operand 1, single buffered']
    #allocation7 [shape = 's32[1]{0}', space=sflag, size = 0x4, scoped, tag = 'scoped memory for actor_custom_forward.1']
    #allocation8 [shape = 'u8[32768]{0}', space=vmem, size = 0x8000, scoped, tag = 'input window, operand 3, single buffered']
    #allocation9 [shape = 's32[1]{0}', space=sflag, size = 0x4, scoped, tag = 'scoped memory for actor_custom_forward.1']
    #allocation10 [shape = 'u8[65536]{0}', space=vmem, size = 0x10000, scoped, tag = 'input window, operand 7, single buffered']
    %15 = vsyncpa [#allocation7], 0
    %16 = vsyncpa [#allocation9], 0
    // Predicated region
    $region2: #{actor_custom_forward.1} parent=1 // pred_check
      _
    $region3: #{actor_custom_forward.1} parent=1 // pred_check_branch
      %18 = sbr.rel (0) target = $region5
    $region4: #{actor_custom_forward.1} parent=1 // pred_region
      _
    $region5: #{actor_custom_forward.1} parent=1 // pred_fallthru
      _
    // Predicated region
    $region6: #{actor_custom_forward.1} parent=1 // pred_check
      _
    $region7: #{actor_custom_forward.1} parent=1 // pred_check_branch
      %20 = sbr.rel (0) target = $region9
    $region8: #{actor_custom_forward.1} parent=1 // pred_region
      %s22 = ssub.s32 1024, 1024
      %23 = vsyncadd [#allocation7], %s22
      %s24 = sshll.u32 [#allocation6], 4
      %s25 = int_to_ptr.vmem [resolvable:$true] %s24
      %30 = dma.hbm_to_vmem [thread:$0]  %s1, 1024, %s25, [#allocation7], 64, 64, 4
    $region9: #{actor_custom_forward.1} parent=1 // pred_fallthru
      _
    // Predicated region
    $region10: #{actor_custom_forward.1} parent=1 // pred_check
      _
    $region11: #{actor_custom_forward.1} parent=1 // pred_check_branch
      %32 = sbr.rel (0) target = $region13
    $region12: #{actor_custom_forward.1} parent=1 // pred_region
      _
    $region13: #{actor_custom_forward.1} parent=1 // pred_fallthru
      _
    // Predicated region
    $region14: #{actor_custom_forward.1} parent=1 // pred_check
      _
    $region15: #{actor_custom_forward.1} parent=1 // pred_check_branch
      %34 = sbr.rel (0) target = $region17
    $region16: #{actor_custom_forward.1} parent=1 // pred_region
      %s36 = ssub.s32 1024, 1024
      %37 = vsyncadd [#allocation9], %s36
      %s38 = sshll.u32 [#allocation8], 4
      %s39 = int_to_ptr.vmem [resolvable:$true] %s38
      %44 = dma.hbm_to_vmem [thread:$0]  %s3, 1024, %s39, [#allocation9], 64, 64, 4
    $region17: #{actor_custom_forward.1} parent=1 // pred_fallthru
      _
    // Predicated region
    $region18: #{actor_custom_forward.1} parent=1 // pred_check
      _
    $region19: #{actor_custom_forward.1} parent=1 // pred_check_branch
      %46 = sbr.rel (0) target = $region21
    $region20: #{actor_custom_forward.1} parent=1 // pred_region
      _
    $region21: #{actor_custom_forward.1} parent=1 // pred_fallthru
      _
    // Predicated region
    $region22: #{actor_custom_forward.1} parent=1 // pred_check
      _
    $region23: #{actor_custom_forward.1} parent=1 // pred_check_branch
      %48 = sbr.rel (0) target = $region25
    $region24: #{actor_custom_forward.1} parent=1 // pred_region
      _
    $region25: #{actor_custom_forward.1} parent=1 // pred_fallthru
      _
    // Predicated region
    $region26: #{actor_custom_forward.1} parent=1 // pred_check
      _
    $region27: #{actor_custom_forward.1} parent=1 // pred_check_branch
      %50 = sbr.rel (0) target = $region29
    $region28: #{actor_custom_forward.1} parent=1 // pred_region
      _
    $region29: #{actor_custom_forward.1} parent=1 // pred_fallthru
      _
    // Predicated region
    $region30: #{actor_custom_forward.1} parent=1 // pred_check
      _
    $region31: #{actor_custom_forward.1} parent=1 // pred_check_branch
      %52 = sbr.rel (0) target = $region33
    $region32: #{actor_custom_forward.1} parent=1 // pred_region
      %s54 = ssub.s32 2048, 2048
      %55 = vsyncadd [#allocation9], %s54
      %s56 = sshll.u32 [#allocation10], 4
      %s57 = int_to_ptr.vmem [resolvable:$true] %s56
      %62 = dma.hbm_to_vmem [thread:$0]  %s7, 2048, %s57, [#allocation9], 128, 128, 8
    $region33: #{actor_custom_forward.1} parent=1 // pred_fallthru
      _
    // Predicated region
    $region34: #{actor_custom_forward.1} parent=1 // pred_check
      _
    $region35: #{actor_custom_forward.1} parent=1 // pred_check_branch
      %64 = sbr.rel (0) target = $region37
    $region36: #{actor_custom_forward.1} parent=1 // pred_region
      _
    $region37: #{actor_custom_forward.1} parent=1 // pred_fallthru
      _
    // Predicated region
    $region38: #{actor_custom_forward.1} parent=1 // pred_check
      _
    $region39: #{actor_custom_forward.1} parent=1 // pred_check_branch
      %66 = sbr.rel (0) target = $region41
    $region40: #{actor_custom_forward.1} parent=1 // pred_region
      _
    $region41: #{actor_custom_forward.1} parent=1 // pred_fallthru
      _
    // Predicated region
    $region42: #{actor_custom_forward.1} parent=1 // pred_check
      _
    $region43: #{actor_custom_forward.1} parent=1 // pred_check_branch
      %68 = sbr.rel (0) target = $region45
    $region44: #{actor_custom_forward.1} parent=1 // pred_region
      %69 = dma.done [#allocation7], 1024
    $region45: #{actor_custom_forward.1} parent=1 // pred_fallthru
      _
    // Predicated region
    $region46: #{actor_custom_forward.1} parent=1 // pred_check
      _
    $region47: #{actor_custom_forward.1} parent=1 // pred_check_branch
      %71 = sbr.rel (0) target = $region49
    $region48: #{actor_custom_forward.1} parent=1 // pred_region
      %72 = dma.done [#allocation9], 1024
    $region49: #{actor_custom_forward.1} parent=1 // pred_fallthru
      _
    // Predicated region
    $region50: #{actor_custom_forward.1} parent=1 // pred_check
      _
    $region51: #{actor_custom_forward.1} parent=1 // pred_check_branch
      %74 = sbr.rel (0) target = $region53
    $region52: #{actor_custom_forward.1} parent=1 // pred_region
      %75 = dma.done [#allocation9], 2048
    $region53: #{actor_custom_forward.1} parent=1 // pred_fallthru
      _
    %p77 = scmp.eq.s32.totalorder 0, 0
    // Predicated region
    $region54: #{actor_custom_forward.1} parent=1 // pred_check
      %p78 = pneg %p77
    $region55: #{actor_custom_forward.1} parent=1 // pred_check_branch
      %80 = sbr.rel (%p78) target = $region57
    $region56: #{actor_custom_forward.1} parent=1 // pred_region
      %v81 = vld [vmem:[%s0] sm:$0xf]
      %v82 = vld [vmem:[%s0 + $0x4] sm:$0xf]
      %v83 = vld [vmem:[#allocation6] sm:$0xf]
      %v84 = vld [vmem:[#allocation6 + $0x4] sm:$0xf]
      %v85 = vld [vmem:[#allocation6 + $0x8] sm:$0xf]
      %v86 = vld [vmem:[#allocation6 + $0xc] sm:$0xf]
      %v87 = vld [vmem:[#allocation6 + $0x10] sm:$0xf]
      %v88 = vld [vmem:[#allocation6 + $0x14] sm:$0xf]
      %v89 = vld [vmem:[#allocation6 + $0x18] sm:$0xf]
      %v90 = vld [vmem:[#allocation6 + $0x1c] sm:$0xf]
      %v91 = vld [vmem:[#allocation6 + $0x20] sm:$0xf]
      %v92 = vld [vmem:[#allocation6 + $0x24] sm:$0xf]
      %v93 = vld [vmem:[#allocation6 + $0x28] sm:$0xf]
      %v94 = vld [vmem:[#allocation6 + $0x2c] sm:$0xf]
      %v95 = vld [vmem:[#allocation6 + $0x30] sm:$0xf]
      %v96 = vld [vmem:[#allocation6 + $0x34] sm:$0xf]
      %v97 = vld [vmem:[#allocation6 + $0x38] sm:$0xf]
      %v98 = vld [vmem:[#allocation6 + $0x3c] sm:$0xf]
      %v99 = vld [vmem:[%s2] sm:$0x1]
      %v101 = vlaneseq
      %v102 = vshrl.u32 %v101, 7
      %v103 = vsub.s32 0, %v102
      %v104 = vrot.slane %v99, %v103
      %v108 = vunpack.c.l.b16 %v81
      %v109 = vunpack.c.l.b16 %v82
      %v110 = vpack.c.b16 %v109, %v108
      %v128 = vunpack.c.l.b16 %v83
      %v129 = vunpack.c.l.b16 %v84
      %v130 = vunpack.c.l.b16 %v85
      %v131 = vunpack.c.l.b16 %v86
      %v132 = vunpack.c.l.b16 %v87
      %v133 = vunpack.c.l.b16 %v88
      %v134 = vunpack.c.l.b16 %v89
      %v135 = vunpack.c.l.b16 %v90
      %v136 = vunpack.c.l.b16 %v91
      %v137 = vunpack.c.l.b16 %v92
      %v138 = vunpack.c.l.b16 %v93
      %v139 = vunpack.c.l.b16 %v94
      %v140 = vunpack.c.l.b16 %v95
      %v141 = vunpack.c.l.b16 %v96
      %v142 = vunpack.c.l.b16 %v97
      %v143 = vunpack.c.l.b16 %v98
      %v144 = vpack.c.b16 %v129, %v128
      %v145 = vpack.c.b16 %v131, %v130
      %v146 = vpack.c.b16 %v133, %v132
      %v147 = vpack.c.b16 %v135, %v134
      %v148 = vpack.c.b16 %v137, %v136
      %v149 = vpack.c.b16 %v139, %v138
      %v150 = vpack.c.b16 %v141, %v140
      %v151 = vpack.c.b16 %v143, %v142
      %160 = vmatprep.subr.bf16.mxu0 0
      %161 = vmatpush1.bf16.msra.mxu0 %v144
      %162 = vmatprep.subr.bf16.mxu0 0
      %163 = vmatpush1.bf16.msra.mxu0 %v145
      %164 = vmatprep.subr.bf16.mxu0 0
      %165 = vmatpush1.bf16.msra.mxu0 %v146
      %166 = vmatprep.subr.bf16.mxu0 0
      %167 = vmatpush1.bf16.msra.mxu0 %v147
      %168 = vmatprep.subr.bf16.mxu0 0
      %169 = vmatpush1.bf16.msra.mxu0 %v148
      %170 = vmatprep.subr.bf16.mxu0 0
      %171 = vmatpush1.bf16.msra.mxu0 %v149
      %172 = vmatprep.subr.bf16.mxu0 0
      %173 = vmatpush1.bf16.msra.mxu0 %v150
      %174 = vmatprep.subr.bf16.mxu0 0
      %175 = vmatpush1.bf16.msra.mxu0 %v151
      %176 = vmatprep.subr.bf16.mxu0 0
      %177 = vmatpush1.bf16.msra.mxu0 0
      %178 = vmatprep.subr.bf16.mxu0 0
      %179 = vmatpush1.bf16.msra.mxu0 0
      %180 = vmatprep.subr.bf16.mxu0 0
      %181 = vmatpush1.bf16.msra.mxu0 0
      %182 = vmatprep.subr.bf16.mxu0 0
      %183 = vmatpush1.bf16.msra.mxu0 0
      %184 = vmatprep.subr.bf16.mxu0 0
      %185 = vmatpush1.bf16.msra.mxu0 0
      %186 = vmatprep.subr.bf16.mxu0 0
      %187 = vmatpush1.bf16.msra.mxu0 0
      %188 = vmatprep.subr.bf16.mxu0 0
      %189 = vmatpush1.bf16.msra.mxu0 0
      %190 = vmatprep.subr.bf16.mxu0 0
      %191 = vmatpush1.bf16.msra.mxu0 0
      %192 = vmatprep.mubr.bf16.mxu0 0
      %193 = vmatmul.mubr.bf16.gmra.mrb[0].mxu0 %v110
      %v194 = vpop.f32.mrb[0].mxu0
      %v195 = vadd.f32 %v104, %v194
      %v196 = vpop.f32.mrb[0].mxu0
      %v197 = vpop.f32.mrb[0].mxu0
      %v198 = vadd.f32 %v104, %v197
      %v199 = vpop.f32.mrb[0].mxu0
      %200 = vdwg.mxu0
      %v201 = vmax.f32 %v195, 0.0
      %v202 = vmax.f32 %v198, 0.0
      %v203 = vpack.c.bf16 %v202, %v201
      %v204 = vld [vmem:[#allocation8] sm:$0xf]
      %v205 = vld [vmem:[#allocation8 + $0x4] sm:$0xf]
      %v206 = vld [vmem:[#allocation8 + $0x8] sm:$0xf]
      %v207 = vld [vmem:[#allocation8 + $0xc] sm:$0xf]
      %v208 = vld [vmem:[#allocation8 + $0x10] sm:$0xf]
      %v209 = vld [vmem:[#allocation8 + $0x14] sm:$0xf]
      %v210 = vld [vmem:[#allocation8 + $0x18] sm:$0xf]
      %v211 = vld [vmem:[#allocation8 + $0x1c] sm:$0xf]
      %v212 = vld [vmem:[#allocation8 + $0x20] sm:$0xf]
      %v213 = vld [vmem:[#allocation8 + $0x24] sm:$0xf]
      %v214 = vld [vmem:[#allocation8 + $0x28] sm:$0xf]
      %v215 = vld [vmem:[#allocation8 + $0x2c] sm:$0xf]
      %v216 = vld [vmem:[#allocation8 + $0x30] sm:$0xf]
      %v217 = vld [vmem:[#allocation8 + $0x34] sm:$0xf]
      %v218 = vld [vmem:[#allocation8 + $0x38] sm:$0xf]
      %v219 = vld [vmem:[#allocation8 + $0x3c] sm:$0xf]
      %v220 = vld [vmem:[%s4] sm:$0x1]
      %v222 = vlaneseq
      %v223 = vshrl.u32 %v222, 7
      %v224 = vsub.s32 0, %v223
      %v225 = vrot.slane %v220, %v224
      %v243 = vunpack.c.l.b16 %v204
      %v244 = vunpack.c.l.b16 %v205
      %v245 = vunpack.c.l.b16 %v206
      %v246 = vunpack.c.l.b16 %v207
      %v247 = vunpack.c.l.b16 %v208
      %v248 = vunpack.c.l.b16 %v209
      %v249 = vunpack.c.l.b16 %v210
      %v250 = vunpack.c.l.b16 %v211
      %v251 = vunpack.c.l.b16 %v212
      %v252 = vunpack.c.l.b16 %v213
      %v253 = vunpack.c.l.b16 %v214
      %v254 = vunpack.c.l.b16 %v215
      %v255 = vunpack.c.l.b16 %v216
      %v256 = vunpack.c.l.b16 %v217
      %v257 = vunpack.c.l.b16 %v218
      %v258 = vunpack.c.l.b16 %v219
      %v259 = vpack.c.b16 %v244, %v243
      %v260 = vpack.c.b16 %v246, %v245
      %v261 = vpack.c.b16 %v248, %v247
      %v262 = vpack.c.b16 %v250, %v249
      %v263 = vpack.c.b16 %v252, %v251
      %v264 = vpack.c.b16 %v254, %v253
      %v265 = vpack.c.b16 %v256, %v255
      %v266 = vpack.c.b16 %v258, %v257
      %275 = vmatprep.subr.bf16.mxu0 0
      %276 = vmatpush1.bf16.msra.mxu0 %v259
      %277 = vmatprep.subr.bf16.mxu0 0
      %278 = vmatpush1.bf16.msra.mxu0 %v260
      %279 = vmatprep.subr.bf16.mxu0 0
      %280 = vmatpush1.bf16.msra.mxu0 %v261
      %281 = vmatprep.subr.bf16.mxu0 0
      %282 = vmatpush1.bf16.msra.mxu0 %v262
      %283 = vmatprep.subr.bf16.mxu0 0
      %284 = vmatpush1.bf16.msra.mxu0 %v263
      %285 = vmatprep.subr.bf16.mxu0 0
      %286 = vmatpush1.bf16.msra.mxu0 %v264
      %287 = vmatprep.subr.bf16.mxu0 0
      %288 = vmatpush1.bf16.msra.mxu0 %v265
      %289 = vmatprep.subr.bf16.mxu0 0
      %290 = vmatpush1.bf16.msra.mxu0 %v266
      %291 = vmatprep.subr.bf16.mxu0 0
      %292 = vmatpush1.bf16.msra.mxu0 0
      %293 = vmatprep.subr.bf16.mxu0 0
      %294 = vmatpush1.bf16.msra.mxu0 0
      %295 = vmatprep.subr.bf16.mxu0 0
      %296 = vmatpush1.bf16.msra.mxu0 0
      %297 = vmatprep.subr.bf16.mxu0 0
      %298 = vmatpush1.bf16.msra.mxu0 0
      %299 = vmatprep.subr.bf16.mxu0 0
      %300 = vmatpush1.bf16.msra.mxu0 0
      %301 = vmatprep.subr.bf16.mxu0 0
      %302 = vmatpush1.bf16.msra.mxu0 0
      %303 = vmatprep.subr.bf16.mxu0 0
      %304 = vmatpush1.bf16.msra.mxu0 0
      %305 = vmatprep.subr.bf16.mxu0 0
      %306 = vmatpush1.bf16.msra.mxu0 0
      %307 = vmatprep.mubr.bf16.mxu0 0
      %308 = vmatmul.mubr.bf16.gmra.mrb[0].mxu0 %v203
      %v309 = vpop.f32.mrb[0].mxu0
      %v310 = vadd.f32 %v225, %v309
      %v311 = vpop.f32.mrb[0].mxu0
      %v312 = vpop.f32.mrb[0].mxu0
      %v313 = vadd.f32 %v225, %v312
      %v314 = vpop.f32.mrb[0].mxu0
      %315 = vdwg.mxu0
      %v316 = vmax.f32 %v310, 0.0
      %v317 = vmax.f32 %v313, 0.0
      %v318 = vpack.c.bf16 %v317, %v316
      %319 = vst [vmem:[#allocation2] sm:$0xff] %v318
      %vm320 = vcmask 7168
      %321 = vst.msk [vmem:[#allocation3] sm:$0xff] %vm320, -inf
      %322 = vst.msk [vmem:[#allocation3 + $0x8] sm:$0xff] %vm320, -inf
      %323 = vst.msk [vmem:[#allocation4] sm:$0xff] %vm320, 0.0
      %324 = vst.msk [vmem:[#allocation4 + $0x8] sm:$0xff] %vm320, 0.0
      %325 = vst.msk [vmem:[#allocation5] sm:$0xff] %vm320, 0.0
      %326 = vst.msk [vmem:[#allocation5 + $0x8] sm:$0xff] %vm320, 0.0
    $region57: #{actor_custom_forward.1} parent=1 // pred_fallthru
      _
    %v327 = vld [vmem:[%s0] sm:$0xf]
    %v328 = vld [vmem:[%s0 + $0x4] sm:$0xf]
    %v329 = vld [vmem:[#allocation10] sm:$0xff]
    %v330 = vld [vmem:[#allocation10 + $0x8] sm:$0xff]
    %v331 = vld [vmem:[#allocation10 + $0x10] sm:$0xff]
    %v332 = vld [vmem:[#allocation10 + $0x18] sm:$0xff]
    %v333 = vld [vmem:[#allocation10 + $0x20] sm:$0xff]
    %v334 = vld [vmem:[#allocation10 + $0x28] sm:$0xff]
    %v335 = vld [vmem:[#allocation10 + $0x30] sm:$0xff]
    %v336 = vld [vmem:[#allocation10 + $0x38] sm:$0xff]
    %v337 = vld [vmem:[#allocation10 + $0x40] sm:$0xff]
    %v338 = vld [vmem:[#allocation10 + $0x48] sm:$0xff]
    %v339 = vld [vmem:[#allocation10 + $0x50] sm:$0xff]
    %v340 = vld [vmem:[#allocation10 + $0x58] sm:$0xff]
    %v341 = vld [vmem:[#allocation10 + $0x60] sm:$0xff]
    %v342 = vld [vmem:[#allocation10 + $0x68] sm:$0xff]
    %v343 = vld [vmem:[#allocation10 + $0x70] sm:$0xff]
    %v344 = vld [vmem:[#allocation10 + $0x78] sm:$0xff]
    %v345 = vld [vmem:[%s8] sm:$0x3]
    %v347 = vlaneseq
    %v348 = vshrl.u32 %v347, 7
    %v349 = vsub.s32 0, %v348
    %v350 = vrot.slane %v345, %v349
    %v351 = vlaneseq
    %v352 = vshrl.u32 %v351, 7
    %v353 = vsub.s32 1, %v352
    %v354 = vrot.slane %v345, %v353
    %v359 = vunpack.c.l.b16 %v327
    %v360 = vunpack.c.l.b16 %v328
    %v361 = vpack.c.b16 %v360, %v359
    %v379 = vunpack.c.l.b16 %v329
    %v380 = vunpack.c.h.b16 %v329
    %v381 = vunpack.c.l.b16 %v330
    %v382 = vunpack.c.h.b16 %v330
    %v383 = vunpack.c.l.b16 %v331
    %v384 = vunpack.c.h.b16 %v331
    %v385 = vunpack.c.l.b16 %v332
    %v386 = vunpack.c.h.b16 %v332
    %v387 = vunpack.c.l.b16 %v333
    %v388 = vunpack.c.h.b16 %v333
    %v389 = vunpack.c.l.b16 %v334
    %v390 = vunpack.c.h.b16 %v334
    %v391 = vunpack.c.l.b16 %v335
    %v392 = vunpack.c.h.b16 %v335
    %v393 = vunpack.c.l.b16 %v336
    %v394 = vunpack.c.h.b16 %v336
    %v395 = vunpack.c.l.b16 %v337
    %v396 = vunpack.c.h.b16 %v337
    %v397 = vunpack.c.l.b16 %v338
    %v398 = vunpack.c.h.b16 %v338
    %v399 = vunpack.c.l.b16 %v339
    %v400 = vunpack.c.h.b16 %v339
    %v401 = vunpack.c.l.b16 %v340
    %v402 = vunpack.c.h.b16 %v340
    %v403 = vunpack.c.l.b16 %v341
    %v404 = vunpack.c.h.b16 %v341
    %v405 = vunpack.c.l.b16 %v342
    %v406 = vunpack.c.h.b16 %v342
    %v407 = vunpack.c.l.b16 %v343
    %v408 = vunpack.c.h.b16 %v343
    %v409 = vunpack.c.l.b16 %v344
    %v410 = vunpack.c.h.b16 %v344
    %v411 = vpack.c.b16 %v381, %v379
    %v412 = vpack.c.b16 %v382, %v380
    %v413 = vpack.c.b16 %v385, %v383
    %v414 = vpack.c.b16 %v386, %v384
    %v415 = vpack.c.b16 %v389, %v387
    %v416 = vpack.c.b16 %v390, %v388
    %v417 = vpack.c.b16 %v393, %v391
    %v418 = vpack.c.b16 %v394, %v392
    %v419 = vpack.c.b16 %v397, %v395
    %v420 = vpack.c.b16 %v398, %v396
    %v421 = vpack.c.b16 %v401, %v399
    %v422 = vpack.c.b16 %v402, %v400
    %v423 = vpack.c.b16 %v405, %v403
    %v424 = vpack.c.b16 %v406, %v404
    %v425 = vpack.c.b16 %v409, %v407
    %v426 = vpack.c.b16 %v410, %v408
    %443 = vmatprep.subr.bf16.mxu0 %v412
    %444 = vmatpush1.bf16.msra.mxu0 %v411
    %445 = vmatprep.subr.bf16.mxu0 %v414
    %446 = vmatpush1.bf16.msra.mxu0 %v413
    %447 = vmatprep.subr.bf16.mxu0 %v416
    %448 = vmatpush1.bf16.msra.mxu0 %v415
    %449 = vmatprep.subr.bf16.mxu0 %v418
    %450 = vmatpush1.bf16.msra.mxu0 %v417
    %451 = vmatprep.subr.bf16.mxu0 %v420
    %452 = vmatpush1.bf16.msra.mxu0 %v419
    %453 = vmatprep.subr.bf16.mxu0 %v422
    %454 = vmatpush1.bf16.msra.mxu0 %v421
    %455 = vmatprep.subr.bf16.mxu0 %v424
    %456 = vmatpush1.bf16.msra.mxu0 %v423
    %457 = vmatprep.subr.bf16.mxu0 %v426
    %458 = vmatpush1.bf16.msra.mxu0 %v425
    %459 = vmatprep.subr.bf16.mxu0 0
    %460 = vmatpush1.bf16.msra.mxu0 0
    %461 = vmatprep.subr.bf16.mxu0 0
    %462 = vmatpush1.bf16.msra.mxu0 0
    %463 = vmatprep.subr.bf16.mxu0 0
    %464 = vmatpush1.bf16.msra.mxu0 0
    %465 = vmatprep.subr.bf16.mxu0 0
    %466 = vmatpush1.bf16.msra.mxu0 0
    %467 = vmatprep.subr.bf16.mxu0 0
    %468 = vmatpush1.bf16.msra.mxu0 0
    %469 = vmatprep.subr.bf16.mxu0 0
    %470 = vmatpush1.bf16.msra.mxu0 0
    %471 = vmatprep.subr.bf16.mxu0 0
    %472 = vmatpush1.bf16.msra.mxu0 0
    %473 = vmatprep.subr.bf16.mxu0 0
    %474 = vmatpush1.bf16.msra.mxu0 0
    %475 = vmatprep.mubr.bf16.mxu0 0
    %476 = vmatmul.mubr.bf16.gmra.mrb[0].mxu0 %v361
    %v477 = vpop.f32.mrb[0].mxu0
    %v478 = vadd.f32 %v350, %v477
    %v479 = vpop.f32.mrb[0].mxu0
    %v480 = vadd.f32 %v354, %v479
    %v481 = vpop.f32.mrb[0].mxu0
    %v482 = vadd.f32 %v350, %v481
    %v483 = vpop.f32.mrb[0].mxu0
    %v484 = vadd.f32 %v354, %v483
    %485 = vdwg.mxu0
    %v486 = vld [vmem:[#allocation2] sm:$0xff]
    %v487 = vld [vmem:[%s5] sm:$0xff]
    %v488 = vld [vmem:[%s5 + $0x8] sm:$0xff]
    %v489 = vld [vmem:[%s5 + $0x10] sm:$0xff]
    %v490 = vld [vmem:[%s5 + $0x18] sm:$0xff]
    %v491 = vld [vmem:[%s5 + $0x20] sm:$0xff]
    %v492 = vld [vmem:[%s5 + $0x28] sm:$0xff]
    %v493 = vld [vmem:[%s5 + $0x30] sm:$0xff]
    %v494 = vld [vmem:[%s5 + $0x38] sm:$0xff]
    %v495 = vld [vmem:[%s5 + $0x40] sm:$0xff]
    %v496 = vld [vmem:[%s5 + $0x48] sm:$0xff]
    %v497 = vld [vmem:[%s5 + $0x50] sm:$0xff]
    %v498 = vld [vmem:[%s5 + $0x58] sm:$0xff]
    %v499 = vld [vmem:[%s5 + $0x60] sm:$0xff]
    %v500 = vld [vmem:[%s5 + $0x68] sm:$0xff]
    %v501 = vld [vmem:[%s5 + $0x70] sm:$0xff]
    %v502 = vld [vmem:[%s5 + $0x78] sm:$0xff]
    %v503 = vld [vmem:[%s6] sm:$0x3]
    %v505 = vlaneseq
    %v506 = vshrl.u32 %v505, 7
    %v507 = vsub.s32 0, %v506
    %v508 = vrot.slane %v503, %v507
    %v509 = vlaneseq
    %v510 = vshrl.u32 %v509, 7
    %v511 = vsub.s32 1, %v510
    %v512 = vrot.slane %v503, %v511
    %v531 = vunpack.c.l.b16 %v487
    %v532 = vunpack.c.h.b16 %v487
    %v533 = vunpack.c.l.b16 %v488
    %v534 = vunpack.c.h.b16 %v488
    %v535 = vunpack.c.l.b16 %v489
    %v536 = vunpack.c.h.b16 %v489
    %v537 = vunpack.c.l.b16 %v490
    %v538 = vunpack.c.h.b16 %v490
    %v539 = vunpack.c.l.b16 %v491
    %v540 = vunpack.c.h.b16 %v491
    %v541 = vunpack.c.l.b16 %v492
    %v542 = vunpack.c.h.b16 %v492
    %v543 = vunpack.c.l.b16 %v493
    %v544 = vunpack.c.h.b16 %v493
    %v545 = vunpack.c.l.b16 %v494
    %v546 = vunpack.c.h.b16 %v494
    %v547 = vunpack.c.l.b16 %v495
    %v548 = vunpack.c.h.b16 %v495
    %v549 = vunpack.c.l.b16 %v496
    %v550 = vunpack.c.h.b16 %v496
    %v551 = vunpack.c.l.b16 %v497
    %v552 = vunpack.c.h.b16 %v497
    %v553 = vunpack.c.l.b16 %v498
    %v554 = vunpack.c.h.b16 %v498
    %v555 = vunpack.c.l.b16 %v499
    %v556 = vunpack.c.h.b16 %v499
    %v557 = vunpack.c.l.b16 %v500
    %v558 = vunpack.c.h.b16 %v500
    %v559 = vunpack.c.l.b16 %v501
    %v560 = vunpack.c.h.b16 %v501
    %v561 = vunpack.c.l.b16 %v502
    %v562 = vunpack.c.h.b16 %v502
    %v563 = vpack.c.b16 %v533, %v531
    %v564 = vpack.c.b16 %v534, %v532
    %v565 = vpack.c.b16 %v537, %v535
    %v566 = vpack.c.b16 %v538, %v536
    %v567 = vpack.c.b16 %v541, %v539
    %v568 = vpack.c.b16 %v542, %v540
    %v569 = vpack.c.b16 %v545, %v543
    %v570 = vpack.c.b16 %v546, %v544
    %v571 = vpack.c.b16 %v549, %v547
    %v572 = vpack.c.b16 %v550, %v548
    %v573 = vpack.c.b16 %v553, %v551
    %v574 = vpack.c.b16 %v554, %v552
    %v575 = vpack.c.b16 %v557, %v555
    %v576 = vpack.c.b16 %v558, %v556
    %v577 = vpack.c.b16 %v561, %v559
    %v578 = vpack.c.b16 %v562, %v560
    %595 = vmatprep.subr.bf16.mxu0 %v564
    %596 = vmatpush1.bf16.msra.mxu0 %v563
    %597 = vmatprep.subr.bf16.mxu0 %v566
    %598 = vmatpush1.bf16.msra.mxu0 %v565
    %599 = vmatprep.subr.bf16.mxu0 %v568
    %600 = vmatpush1.bf16.msra.mxu0 %v567
    %601 = vmatprep.subr.bf16.mxu0 %v570
    %602 = vmatpush1.bf16.msra.mxu0 %v569
    %603 = vmatprep.subr.bf16.mxu0 %v572
    %604 = vmatpush1.bf16.msra.mxu0 %v571
    %605 = vmatprep.subr.bf16.mxu0 %v574
    %606 = vmatpush1.bf16.msra.mxu0 %v573
    %607 = vmatprep.subr.bf16.mxu0 %v576
    %608 = vmatpush1.bf16.msra.mxu0 %v575
    %609 = vmatprep.subr.bf16.mxu0 %v578
    %610 = vmatpush1.bf16.msra.mxu0 %v577
    %611 = vmatprep.subr.bf16.mxu0 0
    %612 = vmatpush1.bf16.msra.mxu0 0
    %613 = vmatprep.subr.bf16.mxu0 0
    %614 = vmatpush1.bf16.msra.mxu0 0
    %615 = vmatprep.subr.bf16.mxu0 0
    %616 = vmatpush1.bf16.msra.mxu0 0
    %617 = vmatprep.subr.bf16.mxu0 0
    %618 = vmatpush1.bf16.msra.mxu0 0
    %619 = vmatprep.subr.bf16.mxu0 0
    %620 = vmatpush1.bf16.msra.mxu0 0
    %621 = vmatprep.subr.bf16.mxu0 0
    %622 = vmatpush1.bf16.msra.mxu0 0
    %623 = vmatprep.subr.bf16.mxu0 0
    %624 = vmatpush1.bf16.msra.mxu0 0
    %625 = vmatprep.subr.bf16.mxu0 0
    %626 = vmatpush1.bf16.msra.mxu0 0
    %627 = vmatprep.mubr.bf16.mxu0 0
    %628 = vmatmul.mubr.bf16.gmra.mrb[0].mxu0 %v486
    %v629 = vpop.f32.mrb[0].mxu0
    %v630 = vadd.f32 %v508, %v629
    %v631 = vpop.f32.mrb[0].mxu0
    %v632 = vadd.f32 %v512, %v631
    %v633 = vpop.f32.mrb[0].mxu0
    %v634 = vadd.f32 %v508, %v633
    %v635 = vpop.f32.mrb[0].mxu0
    %v636 = vadd.f32 %v512, %v635
    %637 = vdwg.mxu0
    %v638 = vadd.f32 %v478, %v630
    %v639 = vadd.f32 %v480, %v632
    %v640 = vadd.f32 %v482, %v634
    %v641 = vadd.f32 %v484, %v636
    %s642 = smul.u32 0, 256
    %v643 = vlaneseq
    %v644 = vand.u32 %v643, 127
    %v645 = vadd.s32 %v644, 128
    %v646 = vstv %s642
    %v647 = vadd.s32 %v646, %v644
    %v648 = vadd.s32 %v646, %v645
    %v649 = vld [vmem:[#allocation3] sm:$0xff]
    %v650 = vld [vmem:[#allocation3 + $0x8] sm:$0xff]
    %v651 = vmax.f32 %v638, %v639
    %652 = vmax.xlane.f32.xlu0 %v651
    %v653 = vpop.xlane.xlu0 %652
    %v654 = vmax.f32 %v640, %v641
    %655 = vmax.xlane.f32.xlu0 %v654
    %v656 = vpop.xlane.xlu0 %655
    %v657 = vmax.f32 %v649, %v653
    %v658 = vmax.f32 %v650, %v656
    %v659 = vsub.f32 %v649, %v657
    %v660 = vsub.f32 %v650, %v658
    %v661 = vmul.f32 %v659, 1.442695
    %v662 = vpow.pop %v661
    %v663 = vmul.f32 %v660, 1.442695
    %v664 = vpow.pop %v663
    %v665 = vld [vmem:[#allocation4] sm:$0xff]
    %v666 = vld [vmem:[#allocation4 + $0x8] sm:$0xff]
    %v667 = vmul.f32 %v662, %v665
    %v668 = vmul.f32 %v664, %v666
    %670 = vset.pattern.permute.xlu0 0
    %671 = vperm.xlu0 %670, %v657
    %v672 = vpop.permute.xlu0 %671
    %675 = vset.pattern.permute.xlu0 0
    %676 = vperm.xlu0 %675, %v658
    %v677 = vpop.permute.xlu0 %676
    %v679 = vsub.f32 %v638, %v672
    %v680 = vsub.f32 %v639, %v672
    %v681 = vsub.f32 %v640, %v677
    %v682 = vsub.f32 %v641, %v677
    %v683 = vmul.f32 %v679, 1.442695
    %v684 = vpow.pop %v683
    %v685 = vmul.f32 %v680, 1.442695
    %v686 = vpow.pop %v685
    %v687 = vmul.f32 %v681, 1.442695
    %v688 = vpow.pop %v687
    %v689 = vmul.f32 %v682, 1.442695
    %v690 = vpow.pop %v689
    %v691 = vadd.f32 %v684, %v686
    %692 = vadd.xlane.f32.xlu0 %v691
    %v693 = vpop.xlane.xlu0 %692
    %v694 = vadd.f32 %v688, %v690
    %695 = vadd.xlane.f32.xlu0 %v694
    %v696 = vpop.xlane.xlu0 %695
    %v697 = vadd.f32 %v667, %v693
    %v698 = vadd.f32 %v668, %v696
    %vm699 = vcmask 7168
    %700 = vst.msk [vmem:[#allocation4] sm:$0xff] %vm699, %v697
    %701 = vst.msk [vmem:[#allocation4 + $0x8] sm:$0xff] %vm699, %v698
    %702 = vst.msk [vmem:[#allocation3] sm:$0xff] %vm699, %v657
    %703 = vst.msk [vmem:[#allocation3 + $0x8] sm:$0xff] %vm699, %v658
    %v704 = vld [vmem:[#allocation5] sm:$0xff]
    %v705 = vld [vmem:[#allocation5 + $0x8] sm:$0xff]
    %v706 = vld [vmem:[%s9] sm:$0xff]
    %v707 = vld [vmem:[%s9 + $0x8] sm:$0xff]
    %708 = vset.pattern.permute.xlu0 0
    %709 = vperm.xlu0 %708, %v706
    %v710 = vpop.permute.xlu0 %709
    %711 = vset.pattern.permute.xlu0 0
    %712 = vperm.xlu0 %711, %v707
    %v713 = vpop.permute.xlu0 %712
    %vm714 = vcmp.eq.s32.totalorder %v647, %v710
    %vm715 = vcmp.eq.s32.totalorder %v648, %v710
    %vm716 = vcmp.eq.s32.totalorder %v647, %v713
    %vm717 = vcmp.eq.s32.totalorder %v648, %v713
    %v718 = vsel %vm714, %v638, 0.0
    %v719 = vsel %vm715, %v639, 0.0
    %v720 = vsel %vm716, %v640, 0.0
    %v721 = vsel %vm717, %v641, 0.0
    %v722 = vadd.f32 %v718, %v719
    %723 = vadd.xlane.f32.xlu0 %v722
    %v724 = vpop.xlane.xlu0 %723
    %v725 = vadd.f32 %v720, %v721
    %726 = vadd.xlane.f32.xlu0 %v725
    %v727 = vpop.xlane.xlu0 %726
    %v728 = vadd.f32 %v704, %v724
    %v729 = vadd.f32 %v705, %v727
    %730 = vst.msk [vmem:[#allocation5] sm:$0xff] %vm699, %v728
    %731 = vst.msk [vmem:[#allocation5 + $0x8] sm:$0xff] %vm699, %v729
    // Predicated region
    $region58: #{actor_custom_forward.1} parent=1 // pred_check
      %p732 = pneg %p77
    $region59: #{actor_custom_forward.1} parent=1 // pred_check_branch
      %734 = sbr.rel (%p732) target = $region61
    $region60: #{actor_custom_forward.1} parent=1 // pred_region
      %v735 = vld [vmem:[#allocation5] sm:$0xff]
      %v736 = vld [vmem:[#allocation5 + $0x8] sm:$0xff]
      %v737 = vld [vmem:[#allocation3] sm:$0xff]
      %v738 = vld [vmem:[#allocation3 + $0x8] sm:$0xff]
      %v739 = vld [vmem:[#allocation4] sm:$0xff]
      %v740 = vld [vmem:[#allocation4 + $0x8] sm:$0xff]
      %v741 = vlog2.pop %v739
      %v742 = vmul.f32 %v741, 0.6931472
      %v743 = vlog2.pop %v740
      %v744 = vmul.f32 %v743, 0.6931472
      %v745 = vadd.f32 %v737, %v742
      %v746 = vadd.f32 %v738, %v744
      %v747 = vsub.f32 %v735, %v745
      %v748 = vsub.f32 %v736, %v746
      %750 = vset.pattern.permute.xlu0 0
      %751 = vperm.xlu0 %750, %v747
      %v752 = vpop.permute.xlu0 %751
      %755 = vset.pattern.permute.xlu0 0
      %756 = vperm.xlu0 %755, %v748
      %v757 = vpop.permute.xlu0 %756
      %759 = vst [vmem:[%s10] sm:$0xff] %v752
      %760 = vst [vmem:[%s10 + $0x8] sm:$0xff] %v757
    $region61: #{actor_custom_forward.1} parent=1 // pred_fallthru
      _
    // Predicated region
    $region62: #{actor_custom_forward.1} parent=1 // pred_check
      _
    $region63: #{actor_custom_forward.1} parent=1 // pred_check_branch
      %762 = sbr.rel (0) target = $region65
    $region64: #{actor_custom_forward.1} parent=1 // pred_region
      _
    $region65: #{actor_custom_forward.1} parent=1 // pred_fallthru
      _
    // Predicated region
    $region66: #{actor_custom_forward.1} parent=1 // pred_check
      _
    $region67: #{actor_custom_forward.1} parent=1 // pred_check_branch
      %764 = sbr.rel (0) target = $region69
    $region68: #{actor_custom_forward.1} parent=1 // pred_region
      _
    $region69: #{actor_custom_forward.1} parent=1 // pred_fallthru
      _
    %765 = vsyncpa [#allocation7], 1
    %766 = vsyncpa [#allocation9], 1

</llo_original>
